<compile_context>
chip_gen: v6e
topology: v6e:2x2x1
jax: 0.10.0
libtpu: 0.0.40
codegen_flags: <defaults>
</compile_context>

<pallas_src>
import jax
import jax.numpy as jnp
from jax import lax
from jax.experimental import pallas as pl
from jax.experimental.pallas import tpu as pltpu


MAX_TILE_N = 2048            # rows per per-point tile (amortizes ~0.35us grid-step cost)
H_PAD = 128                  # padded channel width of the stored (B, N, .) intermediate
VMEM_LIMIT = 32 * 1024 * 1024


def _pick_tile_n(n, max_tile=MAX_TILE_N):
    """Tile size for the N axis: full axis if small, else a multiple-of-8 divisor,
    else a bounded tile with a cdiv grid + in-kernel tail masking."""
    if n <= max_tile:
        return n
    for t in range(max_tile, 7, -8):
        if n % t == 0:
            return t
    return max_tile


def _const_spec(shape):
    """Full-array block at a constant block index (weights / biases, VMEM-resident)."""
    return pl.BlockSpec(shape, lambda b, n: (0,) * len(shape))


# ----------------------------------------------------------------------------
# In-kernel helpers
# ----------------------------------------------------------------------------
def _dense(h, w, b, relu=True):
    """y = relu(h @ W + b): bf16 MXU operands, f32 accumulation / epilogue."""
    y = jnp.dot(h.astype(w.dtype), w, preferred_element_type=jnp.float32) + b
    if relu:
        y = jnp.maximum(y, 0.0)
    return y


def _mask_tail_rows(h, n_idx, tile_n, n_total, needs_mask):
    """Zero out rows past the true N extent (only on a cdiv tail tile).
    Zero is a safe identity for the max-pool because pooled values are post-ReLU."""
    if not needs_mask:
        return h
    rows = lax.broadcasted_iota(jnp.int32, (h.shape[0], 1), 0)
    valid = (n_idx * tile_n + rows) < n_total
    return jnp.where(valid, h, 0.0)


def _accumulate_partial_max(acc_ref, h, tile_n):
    """Running max kept as an (8, C) f32 scratch: per-tile reduction is a pure-VPU
    elementwise max over row groups; the 8->1 cross-sublane reduce is deferred."""
    c = h.shape[-1]
    if tile_n >= 8 and tile_n % 8 == 0:
        part = h.reshape(tile_n // 8, 8, c).max(axis=0)
        acc_ref[...] = jnp.maximum(acc_ref[...], part)
    else:
        acc_ref[0:1, :] = jnp.maximum(acc_ref[0:1, :],
                                      jnp.max(h, axis=0, keepdims=True))


# ----------------------------------------------------------------------------
# Kernels / wrappers
# ----------------------------------------------------------------------------
def tnet_mlp_pool(x, p1, p2, p3):
    """Input T-Net per-point MLP chain + global max pool: (B, N, Din) -> (B, 256)."""
    B, N, Din = x.shape
    (w1, b1), (w2, b2), (w3, b3) = p1, p2, p3
    c3 = w3.shape[1]
    tile_n = _pick_tile_n(N)
    n_tiles = pl.cdiv(N, tile_n)
    needs_mask = (N % tile_n) != 0

    def kernel(x_ref, w1r, b1r, w2r, b2r, w3r, b3r, o_ref, acc_ref):
        n_idx = pl.program_id(1)

        @pl.when(n_idx == 0)
        def _():
            acc_ref[...] = jnp.zeros(acc_ref.shape, acc_ref.dtype)

        h = _dense(x_ref[0], w1r[...], b1r[...])
        h = _dense(h, w2r[...], b2r[...])
        h = _dense(h, w3r[...], b3r[...])
        h = _mask_tail_rows(h, n_idx, tile_n, N, needs_mask)
        _accumulate_partial_max(acc_ref, h, tile_n)

        @pl.when(n_idx == n_tiles - 1)
        def _():
            o_ref[0] = jnp.max(acc_ref[...], axis=0, keepdims=True)

    out = pl.pallas_call(
        kernel,
        out_shape=jax.ShapeDtypeStruct((B, 1, c3), jnp.float32),
        grid=(B, n_tiles),
        in_specs=[
            pl.BlockSpec((1, tile_n, Din), lambda b, n: (b, n, 0)),
            _const_spec(w1.shape), _const_spec(b1.shape),
            _const_spec(w2.shape), _const_spec(b2.shape),
            _const_spec(w3.shape), _const_spec(b3.shape),
        ],
        out_specs=pl.BlockSpec((1, 1, c3), lambda b, n: (b, 0, 0)),
        scratch_shapes=[pltpu.VMEM((8, c3), jnp.float32)],
        compiler_params=pltpu.CompilerParams(
            dimension_semantics=("parallel", "arbitrary"),
            vmem_limit_bytes=VMEM_LIMIT),
    )(x, w1, b1, w2, b2, w3, b3)
    return out.reshape(B, c3)


def stage1_transform_mlp_featpool(x, tw1, b1, p2, f1, f2, f3):
    """Fused stage 1:
         h   = relu(x @ TW1 + b1)          (input transform folded into W1)
         h   = relu(h @ W2  + b2)          -> stored to HBM as bf16, 128-padded
         f   = feature-T-Net per-point MLP chain on h, running max over N
       Returns (h_pad (B,N,128) bf16, pooled (B, 256) f32)."""
    B, N, Din = x.shape
    w2, b2 = p2
    wf1, bf1 = f1
    wf2, bf2 = f2
    wf3, bf3 = f3
    c_h = w2.shape[1]        # 128 (padded)
    c_pool = wf3.shape[1]    # 256
    tile_n = _pick_tile_n(N)
    n_tiles = pl.cdiv(N, tile_n)
    needs_mask = (N % tile_n) != 0

    def kernel(x_ref, tw1_ref, b1r, w2r, b2r,
               wf1r, bf1r, wf2r, bf2r, wf3r, bf3r,
               h_out_ref, pool_ref, acc_ref):
        n_idx = pl.program_id(1)

        @pl.when(n_idx == 0)
        def _():
            acc_ref[...] = jnp.zeros(acc_ref.shape, acc_ref.dtype)

        # per-point MLP1 with the per-batch input transform pre-folded into the weight
        h = _dense(x_ref[0], tw1_ref[0], b1r[...])          # (tile_n, 64)
        h = _dense(h, w2r[...], b2r[...])                   # (tile_n, 128), pad cols == 0
        h_out_ref[0] = h.astype(h_out_ref.dtype)            # bf16, lane-dense store

        # feature-T-Net per-point chain fused in (h never re-read from HBM)
        f = _dense(h, wf1r[...], bf1r[...])                 # (tile_n, 64)
        f = _dense(f, wf2r[...], bf2r[...])                 # (tile_n, 128)
        f = _dense(f, wf3r[...], bf3r[...])                 # (tile_n, 256)
        f = _mask_tail_rows(f, n_idx, tile_n, N, needs_mask)
        _accumulate_partial_max(acc_ref, f, tile_n)

        @pl.when(n_idx == n_tiles - 1)
        def _():
            pool_ref[0] = jnp.max(acc_ref[...], axis=0, keepdims=True)

    h_out, pooled = pl.pallas_call(
        kernel,
        out_shape=(jax.ShapeDtypeStruct((B, N, c_h), jnp.bfloat16),
                   jax.ShapeDtypeStruct((B, 1, c_pool), jnp.float32)),
        grid=(B, n_tiles),
        in_specs=[
            pl.BlockSpec((1, tile_n, Din), lambda b, n: (b, n, 0)),
            pl.BlockSpec((1,) + tw1.shape[1:], lambda b, n: (b, 0, 0)),
            _const_spec(b1.shape),
            _const_spec(w2.shape), _const_spec(b2.shape),
            _const_spec(wf1.shape), _const_spec(bf1.shape),
            _const_spec(wf2.shape), _const_spec(bf2.shape),
            _const_spec(wf3.shape), _const_spec(bf3.shape),
        ],
        out_specs=(pl.BlockSpec((1, tile_n, c_h), lambda b, n: (b, n, 0)),
                   pl.BlockSpec((1, 1, c_pool), lambda b, n: (b, 0, 0))),
        scratch_shapes=[pltpu.VMEM((8, c_pool), jnp.float32)],
        compiler_params=pltpu.CompilerParams(
            dimension_semantics=("parallel", "arbitrary"),
            vmem_limit_bytes=VMEM_LIMIT),
    )(x, tw1, b1, w2, b2, wf1, bf1, wf2, bf2, wf3, bf3)
    return h_out, pooled.reshape(B, c_pool)


def stage2_transform_mlp_pool(h, tw3, b3, p4, p5):
    """Fused stage 2: (h @ feature_t folded into W3) -> mlp4 -> mlp5 -> max over N."""
    B, N, Ch = h.shape
    w4, b4 = p4
    w5, b5 = p5
    c_pool = w5.shape[1]
    tile_n = _pick_tile_n(N)
    n_tiles = pl.cdiv(N, tile_n)
    needs_mask = (N % tile_n) != 0

    def kernel(h_ref, tw3_ref, b3r, w4r, b4r, w5r, b5r, pool_ref, acc_ref):
        n_idx = pl.program_id(1)

        @pl.when(n_idx == 0)
        def _():
            acc_ref[...] = jnp.zeros(acc_ref.shape, acc_ref.dtype)

        g = _dense(h_ref[0], tw3_ref[0], b3r[...])          # feature transform folded
        g = _dense(g, w4r[...], b4r[...])
        g = _dense(g, w5r[...], b5r[...])
        g = _mask_tail_rows(g, n_idx, tile_n, N, needs_mask)
        _accumulate_partial_max(acc_ref, g, tile_n)

        @pl.when(n_idx == n_tiles - 1)
        def _():
            pool_ref[0] = jnp.max(acc_ref[...], axis=0, keepdims=True)

    pooled = pl.pallas_call(
        kernel,
        out_shape=jax.ShapeDtypeStruct((B, 1, c_pool), jnp.float32),
        grid=(B, n_tiles),
        in_specs=[
            pl.BlockSpec((1, tile_n, Ch), lambda b, n: (b, n, 0)),
            pl.BlockSpec((1,) + tw3.shape[1:], lambda b, n: (b, 0, 0)),
            _const_spec(b3.shape),
            _const_spec(w4.shape), _const_spec(b4.shape),
            _const_spec(w5.shape), _const_spec(b5.shape),
        ],
        out_specs=pl.BlockSpec((1, 1, c_pool), lambda b, n: (b, 0, 0)),
        scratch_shapes=[pltpu.VMEM((8, c_pool), jnp.float32)],
        compiler_params=pltpu.CompilerParams(
            dimension_semantics=("parallel", "arbitrary"),
            vmem_limit_bytes=VMEM_LIMIT),
    )(h, tw3, b3, w4, b4, w5, b5)
    return pooled.reshape(B, c_pool)


def _fc_head_kernel(x_ref, w1, b1, w2, b2, w3, b3, o_ref):
    """Three fused FC layers (last one without ReLU)."""
    h = x_ref[...]
    h = _dense(h, w1[...], b1[...])
    h = _dense(h, w2[...], b2[...])
    h = _dense(h, w3[...], b3[...], relu=False)
    o_ref[...] = h.astype(o_ref.dtype)


def fc_head(x, p1, p2, p3):
    """x:(B,Cin) -> fc1(+ReLU) -> fc2(+ReLU) -> fc3 -> (B,Cout); one full-block kernel."""
    B = x.shape[0]
    cout = p3[0].shape[1]
    vmem = lambda: pl.BlockSpec(memory_space=pltpu.MemorySpace.VMEM)
    return pl.pallas_call(
        _fc_head_kernel,
        out_shape=jax.ShapeDtypeStruct((B, cout), jnp.float32),
        in_specs=[vmem() for _ in range(7)],
        out_specs=vmem(),
        compiler_params=pltpu.CompilerParams(vmem_limit_bytes=VMEM_LIMIT),
    )(x, p1[0], p1[1], p2[0], p2[1], p3[0], p3[1])


# ----------------------------------------------------------------------------
# Per-batch transform fold (tiny einsum in the wrapper)
# ----------------------------------------------------------------------------
def _fold_transform(t, w, pad_rows_to=None):
    """TW = T_b @ W (per batch), optionally zero-padded along the contraction rows."""
    tw = jnp.einsum("bij,jk->bik", t.astype(jnp.float32), w.astype(jnp.float32))
    if pad_rows_to is not None and pad_rows_to > tw.shape[1]:
        tw = jnp.pad(tw, ((0, 0), (0, pad_rows_to - tw.shape[1]), (0, 0)))
    return tw.astype(jnp.bfloat16)


# ----------------------------------------------------------------------------
# Deterministic parameter init (BN folded; eye folded into T-Net fc3 bias;
# bf16 MXU weights; optional zero channel padding to 128)
# ----------------------------------------------------------------------------
def init_dense(key, cin, cout, bn=True, extra_bias=None, pad_in=0, pad_out=0):
    k1, k2, k3, k4 = jax.random.split(key, 4)
    w = jax.random.normal(k1, (cin, cout), jnp.float32) * 0.1
    b = jax.random.normal(k2, (cout,), jnp.float32) * 0.1
    if bn:
        gamma = 1.0 + 0.1 * jax.random.normal(k3, (cout,), jnp.float32)
        beta = 0.1 * jax.random.normal(k4, (cout,), jnp.float32)
        running_mean = jnp.zeros((cout,), jnp.float32)
        running_var = jnp.ones((cout,), jnp.float32)
        scale = gamma * jax.lax.rsqrt(running_var + 1e-5)
        shift = beta - running_mean * scale
    else:
        scale = jnp.ones((cout,), jnp.float32)
        shift = jnp.zeros((cout,), jnp.float32)
    # Fold BN affine: y = x @ (w*scale) + (b*scale + shift)
    w_f = w * scale[None, :]
    b_f = b * scale + shift
    if extra_bias is not None:               # e.g. flattened identity for T-Net fc3
        b_f = b_f + extra_bias
    if pad_out:                              # zero output-channel padding (lane-dense)
        w_f = jnp.pad(w_f, ((0, 0), (0, pad_out)))
        b_f = jnp.pad(b_f, ((0, pad_out),))
    if pad_in:                               # zero input-channel padding
        w_f = jnp.pad(w_f, ((0, pad_in), (0, 0)))
    return (w_f.astype(jnp.bfloat16), b_f.reshape(1, -1).astype(jnp.float32))


def init_tnet(key, din, dout, pad_in=0):
    keys = jax.random.split(key, 6)
    eye_flat = jnp.eye(dout, dtype=jnp.float32).reshape(-1)
    return {
        "mlp1": init_dense(keys[0], din, 64, pad_in=pad_in),
        "mlp2": init_dense(keys[1], 64, 128),
        "mlp3": init_dense(keys[2], 128, 256),
        "fc1": init_dense(keys[3], 256, 256),
        "fc2": init_dense(keys[4], 256, 128),
        # identity matrix folded into fc3's bias (row-major flatten matches .view)
        "fc3": init_dense(keys[5], 128, dout * dout, bn=False, extra_bias=eye_flat),
        "out_dim": dout,
    }


def init_pointnet(key, point_dim=3, num_classes=10):
    keys = jax.random.split(key, 10)
    return {
        "input_transform": init_tnet(keys[0], point_dim, point_dim),
        "feature_transform": init_tnet(keys[1], 64, 64, pad_in=H_PAD - 64),
        "mlp1": init_dense(keys[2], point_dim, 64),                # folded w/ input_t
        "mlp2": init_dense(keys[3], 64, 64, pad_out=H_PAD - 64),   # padded bf16 store
        "mlp3": init_dense(keys[4], 64, 64),                       # folded w/ feature_t
        "mlp4": init_dense(keys[5], 64, 128),
        "mlp5": init_dense(keys[6], 128, 256),
        "fc1": init_dense(keys[7], 256, 128),
        "fc2": init_dense(keys[8], 128, 64),
        "fc3": init_dense(keys[9], 64, num_classes, bn=False),
    }


# ----------------------------------------------------------------------------
# Forward passes
# ----------------------------------------------------------------------------
def tnet_input_forward(params, x):
    """Input T-Net: (B, N, Din) -> (B, Din, Din). Eye already folded into fc3 bias."""
    B = x.shape[0]
    pooled = tnet_mlp_pool(x, params["mlp1"], params["mlp2"], params["mlp3"])
    g = fc_head(pooled, params["fc1"], params["fc2"], params["fc3"])
    D = params["out_dim"]
    return g.reshape(B, D, D)


def pointnet_forward(params, x):
    # x: (B, N, point_dim)
    B = x.shape[0]
    input_t = tnet_input_forward(params["input_transform"], x)        # (B, D, D)

    # Fold the per-batch input transform into mlp1's weight (tiny einsum).
    w1, b1 = params["mlp1"]
    tw1 = _fold_transform(input_t, w1)                                # (B, D, 64) bf16

    # Fused: (x@T)->mlp1->mlp2 (stored bf16/128-wide) + feature-T-Net chain + pool.
    ft = params["feature_transform"]
    h_pad, feat_pooled = stage1_transform_mlp_featpool(
        x, tw1, b1, params["mlp2"], ft["mlp1"], ft["mlp2"], ft["mlp3"])

    # Feature T-Net FC head -> (B, 64, 64) (eye folded into fc3 bias).
    g = fc_head(feat_pooled, ft["fc1"], ft["fc2"], ft["fc3"])
    Df = ft["out_dim"]
    feature_t = g.reshape(B, Df, Df)

    # Fold the feature transform into mlp3's weight; pad rows to the padded h width.
    w3, b3 = params["mlp3"]
    tw3 = _fold_transform(feature_t, w3, pad_rows_to=h_pad.shape[-1])  # (B,128,64) bf16

    # Fused: (h@feature_t)->mlp3->mlp4->mlp5->max over N.
    pooled = stage2_transform_mlp_pool(h_pad, tw3, b3, params["mlp4"], params["mlp5"])

    # fc1 -> fc2 -> (dropout: eval-mode identity) -> fc3, one kernel.
    logits = fc_head(pooled, params["fc1"], params["fc2"], params["fc3"])
    return logits, feature_t


# ----------------------------------------------------------------------------
if __name__ == "__main__":
    key = jax.random.PRNGKey(0)
    kp, kx = jax.random.split(key)

    point_dim = 3
    num_classes = 10
    B, N = 2, 16

    params = init_pointnet(kp, point_dim=point_dim, num_classes=num_classes)
    x = jax.random.normal(kx, (B, N, point_dim), jnp.float32)

    logits, feature_t = pointnet_forward(params, x)
    jax.block_until_ready((logits, feature_t))

    assert logits.shape == (B, num_classes), logits.shape
    assert feature_t.shape == (B, 64, 64), feature_t.shape
    assert jnp.all(jnp.isfinite(logits)) and jnp.all(jnp.isfinite(feature_t))

    print("KERNEL_OK")
</pallas_src>

<mosaic_0001>
module attributes {stable_mosaic.version = 11 : i64} {
  func.func @kernel(%arg0: i32, %arg1: i32, %arg2: memref<1x16x3xf32, #tpu.memory_space<vmem>>, %arg3: memref<3x64xbf16, #tpu.memory_space<vmem>>, %arg4: memref<1x64xf32, #tpu.memory_space<vmem>>, %arg5: memref<64x128xbf16, #tpu.memory_space<vmem>>, %arg6: memref<1x128xf32, #tpu.memory_space<vmem>>, %arg7: memref<128x256xbf16, #tpu.memory_space<vmem>>, %arg8: memref<1x256xf32, #tpu.memory_space<vmem>>, %arg9: memref<1x1x256xf32, #tpu.memory_space<vmem>>, %arg10: memref<8x256xf32, #tpu.memory_space<vmem>>) attributes {dimension_semantics = [#tpu.dimension_semantics<parallel>, #tpu.dimension_semantics<arbitrary>], iteration_bounds = array<i64: 2, 1>, scalar_prefetch = 0 : i64, scratch_operands = 1 : i64, tpu.core_type = #tpu.core_type<tc>, window_params = [{transform_indices = @transform_0, window_bounds = array<i64: 1, 16, 3>}, {pipeline_mode = #tpu.pipeline_mode<synchronous>, transform_indices = @transform_1, window_bounds = array<i64: 3, 64>}, {pipeline_mode = #tpu.pipeline_mode<synchronous>, transform_indices = @transform_2, window_bounds = array<i64: 1, 64>}, {pipeline_mode = #tpu.pipeline_mode<synchronous>, transform_indices = @transform_3, window_bounds = array<i64: 64, 128>}, {pipeline_mode = #tpu.pipeline_mode<synchronous>, transform_indices = @transform_4, window_bounds = array<i64: 1, 128>}, {pipeline_mode = #tpu.pipeline_mode<synchronous>, transform_indices = @transform_5, window_bounds = array<i64: 128, 256>}, {pipeline_mode = #tpu.pipeline_mode<synchronous>, transform_indices = @transform_6, window_bounds = array<i64: 1, 256>}, {transform_indices = @transform_7, window_bounds = array<i64: 1, 1, 256>}]} {
    %c0_i32 = arith.constant 0 : i32
    %0 = arith.cmpi eq, %arg1, %c0_i32 : i32
    %1 = arith.extui %0 : i1 to i32
    %c0_i32_0 = arith.constant 0 : i32
    %2 = arith.cmpi ne, %1, %c0_i32_0 : i32
    scf.if %2 {
      %cst_27 = arith.constant 0.000000e+00 : f32
      %37 = vector.broadcast %cst_27 : f32 to vector<8x256xf32>
      %c0_28 = arith.constant 0 : index
      %c0_29 = arith.constant 0 : index
      %38 = vector.load %arg10[%c0_28, %c0_29] : memref<8x256xf32, #tpu.memory_space<vmem>>, vector<8x256xf32>
      tpu.vector_store %arg10[%c0_28, %c0_29], %37 {strides = array<i32>} : memref<8x256xf32, #tpu.memory_space<vmem>>, vector<8x256xf32>,
    } else {
    }
    %c0 = arith.constant 0 : index
    %c0_1 = arith.constant 0 : index
    %c0_2 = arith.constant 0 : index
    %3 = vector.load %arg2[%c0, %c0_1, %c0_2] : memref<1x16x3xf32, #tpu.memory_space<vmem>>, vector<1x16x3xf32>
    %4 = vector.shape_cast %3 : vector<1x16x3xf32> to vector<16x3xf32>
    %c0_3 = arith.constant 0 : index
    %c0_4 = arith.constant 0 : index
    %5 = vector.load %arg3[%c0_3, %c0_4] : memref<3x64xbf16, #tpu.memory_space<vmem>>, vector<3x64xbf16>
    %c0_5 = arith.constant 0 : index
    %c0_6 = arith.constant 0 : index
    %6 = vector.load %arg4[%c0_5, %c0_6] : memref<1x64xf32, #tpu.memory_space<vmem>>, vector<1x64xf32>
    %7 = arith.truncf %4 : vector<16x3xf32> to vector<16x3xbf16>
    %cst = arith.constant dense<0.000000e+00> : vector<16x64xf32>
    %8 = tpu.matmul %7, %5, %cst {dimension_numbers = #tpu.dot_dimension_numbers<[1], [0], [0], [1], [0, 0, 1, 1], [], []>} : vector<16x3xbf16>, vector<3x64xbf16>, vector<16x64xf32> -> vector<16x64xf32>
    %9 = vector.broadcast %6 : vector<1x64xf32> to vector<16x64xf32>
    %10 = arith.addf %8, %9 : vector<16x64xf32>
    %cst_7 = arith.constant 0.000000e+00 : f32
    %11 = vector.broadcast %cst_7 : f32 to vector<16x64xf32>
    %12 = arith.maximumf %10, %11 : vector<16x64xf32>
    %c0_8 = arith.constant 0 : index
    %c0_9 = arith.constant 0 : index
    %13 = vector.load %arg5[%c0_8, %c0_9] : memref<64x128xbf16, #tpu.memory_space<vmem>>, vector<64x128xbf16>
    %c0_10 = arith.constant 0 : index
    %c0_11 = arith.constant 0 : index
    %14 = vector.load %arg6[%c0_10, %c0_11] : memref<1x128xf32, #tpu.memory_space<vmem>>, vector<1x128xf32>
    %15 = arith.truncf %12 : vector<16x64xf32> to vector<16x64xbf16>
    %cst_12 = arith.constant dense<0.000000e+00> : vector<16x128xf32>
    %16 = tpu.matmul %15, %13, %cst_12 {dimension_numbers = #tpu.dot_dimension_numbers<[1], [0], [0], [1], [0, 0, 1, 1], [], []>} : vector<16x64xbf16>, vector<64x128xbf16>, vector<16x128xf32> -> vector<16x128xf32>
    %17 = vector.broadcast %14 : vector<1x128xf32> to vector<16x128xf32>
    %18 = arith.addf %16, %17 : vector<16x128xf32>
    %cst_13 = arith.constant 0.000000e+00 : f32
    %19 = vector.broadcast %cst_13 : f32 to vector<16x128xf32>
    %20 = arith.maximumf %18, %19 : vector<16x128xf32>
    %c0_14 = arith.constant 0 : index
    %c0_15 = arith.constant 0 : index
    %21 = vector.load %arg7[%c0_14, %c0_15] : memref<128x256xbf16, #tpu.memory_space<vmem>>, vector<128x256xbf16>
    %c0_16 = arith.constant 0 : index
    %c0_17 = arith.constant 0 : index
    %22 = vector.load %arg8[%c0_16, %c0_17] : memref<1x256xf32, #tpu.memory_space<vmem>>, vector<1x256xf32>
    %23 = arith.truncf %20 : vector<16x128xf32> to vector<16x128xbf16>
    %cst_18 = arith.constant dense<0.000000e+00> : vector<16x256xf32>
    %24 = tpu.matmul %23, %21, %cst_18 {dimension_numbers = #tpu.dot_dimension_numbers<[1], [0], [0], [1], [0, 0, 1, 1], [], []>} : vector<16x128xbf16>, vector<128x256xbf16>, vector<16x256xf32> -> vector<16x256xf32>
    %25 = vector.broadcast %22 : vector<1x256xf32> to vector<16x256xf32>
    %26 = arith.addf %24, %25 : vector<16x256xf32>
    %cst_19 = arith.constant 0.000000e+00 : f32
    %27 = vector.broadcast %cst_19 : f32 to vector<16x256xf32>
    %28 = arith.maximumf %26, %27 : vector<16x256xf32>
    %29 = vector.shape_cast %28 : vector<16x256xf32> to vector<2x8x256xf32>
    %cst_20 = arith.constant dense<0xFF800000> : vector<8x256xf32>
    %30 = vector.multi_reduction <maximumf>, %29, %cst_20 [0] : vector<2x8x256xf32> to vector<8x256xf32>
    %c0_21 = arith.constant 0 : index
    %c0_22 = arith.constant 0 : index
    %31 = vector.load %arg10[%c0_21, %c0_22] : memref<8x256xf32, #tpu.memory_space<vmem>>, vector<8x256xf32>
    %32 = arith.maximumf %31, %30 : vector<8x256xf32>
    %c0_23 = arith.constant 0 : index
    %c0_24 = arith.constant 0 : index
    %33 = vector.load %arg10[%c0_23, %c0_24] : memref<8x256xf32, #tpu.memory_space<vmem>>, vector<8x256xf32>
    tpu.vector_store %arg10[%c0_23, %c0_24], %32 {strides = array<i32>} : memref<8x256xf32, #tpu.memory_space<vmem>>, vector<8x256xf32>,
    %c0_i32_25 = arith.constant 0 : i32
    %34 = arith.cmpi eq, %arg1, %c0_i32_25 : i32
    %35 = arith.extui %34 : i1 to i32
    %c0_i32_26 = arith.constant 0 : i32
    %36 = arith.cmpi ne, %35, %c0_i32_26 : i32
    scf.if %36 {
      %c0_27 = arith.constant 0 : index
      %c0_28 = arith.constant 0 : index
      %37 = vector.load %arg10[%c0_27, %c0_28] : memref<8x256xf32, #tpu.memory_space<vmem>>, vector<8x256xf32>
      %cst_29 = arith.constant dense<0xFF800000> : vector<256xf32>
      %38 = vector.multi_reduction <maximumf>, %37, %cst_29 [0] : vector<8x256xf32> to vector<256xf32>
      %39 = vector.shape_cast %38 : vector<256xf32> to vector<1x256xf32>
      %c0_30 = arith.constant 0 : index
      %c0_31 = arith.constant 0 : index
      %c0_32 = arith.constant 0 : index
      %40 = vector.load %arg9[%c0_30, %c0_31, %c0_32] : memref<1x1x256xf32, #tpu.memory_space<vmem>>, vector<1x1x256xf32>
      %41 = vector.shape_cast %40 : vector<1x1x256xf32> to vector<1x256xf32>
      %42 = vector.shape_cast %39 : vector<1x256xf32> to vector<1x1x256xf32>
      tpu.vector_store %arg9[%c0_30, %c0_31, %c0_32], %42 {strides = array<i32>} : memref<1x1x256xf32, #tpu.memory_space<vmem>>, vector<1x1x256xf32>,
    } else {
    }
    return
  }
  func.func @transform_0(%arg0: i32, %arg1: i32) -> (i32, i32, i32) {
    %c0_i32 = arith.constant 0 : i32
    %c0_i32_0 = arith.constant 0 : i32
    return %arg0, %arg1, %c0_i32 : i32, i32, i32
  }
  func.func @transform_1(%arg0: i32, %arg1: i32) -> (i32, i32) {
    %c0_i32 = arith.constant 0 : i32
    %c0_i32_0 = arith.constant 0 : i32
    %c0_i32_1 = arith.constant 0 : i32
    return %c0_i32, %c0_i32_0 : i32, i32
  }
  func.func @transform_2(%arg0: i32, %arg1: i32) -> (i32, i32) {
    %c0_i32 = arith.constant 0 : i32
    %c0_i32_0 = arith.constant 0 : i32
    %c0_i32_1 = arith.constant 0 : i32
    return %c0_i32, %c0_i32_0 : i32, i32
  }
  func.func @transform_3(%arg0: i32, %arg1: i32) -> (i32, i32) {
    %c0_i32 = arith.constant 0 : i32
    %c0_i32_0 = arith.constant 0 : i32
    %c0_i32_1 = arith.constant 0 : i32
    return %c0_i32, %c0_i32_0 : i32, i32
  }
  func.func @transform_4(%arg0: i32, %arg1: i32) -> (i32, i32) {
    %c0_i32 = arith.constant 0 : i32
    %c0_i32_0 = arith.constant 0 : i32
    %c0_i32_1 = arith.constant 0 : i32
    return %c0_i32, %c0_i32_0 : i32, i32
  }
  func.func @transform_5(%arg0: i32, %arg1: i32) -> (i32, i32) {
    %c0_i32 = arith.constant 0 : i32
    %c0_i32_0 = arith.constant 0 : i32
    %c0_i32_1 = arith.constant 0 : i32
    return %c0_i32, %c0_i32_0 : i32, i32
  }
  func.func @transform_6(%arg0: i32, %arg1: i32) -> (i32, i32) {
    %c0_i32 = arith.constant 0 : i32
    %c0_i32_0 = arith.constant 0 : i32
    %c0_i32_1 = arith.constant 0 : i32
    return %c0_i32, %c0_i32_0 : i32, i32
  }
  func.func @transform_7(%arg0: i32, %arg1: i32) -> (i32, i32, i32) {
    %c0_i32 = arith.constant 0 : i32
    %c0_i32_0 = arith.constant 0 : i32
    %c0_i32_1 = arith.constant 0 : i32
    return %arg0, %c0_i32, %c0_i32_0 : i32, i32, i32
  }
}

</mosaic_0001>

<llo_original>
// kernel: tpu_custom_call.1
$region0: #{tpu_custom_call.1}
  #allocation0 [shape = 'u32[]', space=smem, size = 0x4, offset = 0x4, fixed_abs, tag = 'smem constant byte address 0x4 - core index']
  #allocation1 [shape = 'u32[144,128]{1,0:T(1,128)}', space=vmem, size = 0x12000, scoped, tag = 'internal scratch']
  #allocation2 [shape = 'f32[8,256]{1,0:T(8,128)}', space=vmem, size = 0x2000, scoped, tag = 'scratch operand']
  %s0 = inlined_call_operand.vmem [shape: f32[2,16,3], index: 0, kind: input, shape index: {}]
  %s1 = inlined_call_operand.vmem [shape: bf16[3,64], index: 1, kind: input, shape index: {}]
  %s2 = inlined_call_operand.vmem [shape: f32[1,64], index: 2, kind: input, shape index: {}]
  %s3 = inlined_call_operand.vmem [shape: bf16[64,128], index: 3, kind: input, shape index: {}]
  %s4 = inlined_call_operand.vmem [shape: f32[1,128], index: 4, kind: input, shape index: {}]
  %s5 = inlined_call_operand.hbm [shape: bf16[128,256], index: 5, kind: input, shape index: {}]
  %s6 = inlined_call_operand.vmem [shape: f32[1,256], index: 6, kind: input, shape index: {}]
  %s7 = inlined_call_operand.hbm [shape: f32[2,1,256], index: 7, kind: output, shape index: {}]
  %s8 = sld [smem:[#allocation0]]
  $region73: #{tpu_custom_call.1} parent=0
    _
  %s10 = ssub.s32 1, %s8
  %s11 = scalar_select 0, %s10, %s8
  $region1: #{tpu_custom_call.1} parent=0
    #allocation3 [shape = 'u8[65536]{0}', space=vmem, size = 0x10000, scoped, tag = 'input window, operand 5, single buffered']
    #allocation4 [shape = 's32[2]{0}', space=sflag, size = 0x8, scoped, tag = 'scoped memory for tpu_custom_call.1']
    #allocation5 [shape = 's32[2]{0}', space=sflag, size = 0x8, scoped, tag = 'scoped memory for tpu_custom_call.1']
    #allocation6 [shape = 'u8[2048]{0}', space=vmem, size = 0x800, scoped, tag = 'output window, operand 0']
    %12 = vsyncpa [#allocation4], 0
    %13 = vsyncpa [#allocation5], 0
    %s14 = scalar_lea.sflag [#allocation5], 1
    %15 = vsyncpa %s14, 0
    loop: start=0, step=1, limit=4
    $region2: #{tpu_custom_call.1} parent=1 // loop_pre_header
      _
    $region3: #{tpu_custom_call.1} parent=1 // loop_header
      %s17 = sphi 0, %s21
      %p18 = scmp.ge.s32.totalorder %s17, 4
      %s24 = sphi 0, %s36
      %s25 = sphi 0, %s32
      %s26 = sphi 0, %s24
      %s27 = sphi 0, %s25
      %s28 = sphi 0, %s26
      %s29 = sphi 0, %s27
      %s41 = sphi 0, %s43
      %s44 = sphi 0, %s41
      %s45 = sphi 0, %s44
      %s61 = sphi 0, %s45
      %s65 = sphi 0, %s65
      %s67 = sphi 0, %s65
      %s68 = sphi 0, %s67
      %s82 = sphi 0, %s68
      %s86 = sphi 0, %s86
      %s88 = sphi 0, %s86
      %s89 = sphi 0, %s88
      %s103 = sphi 0, %s89
      %s107 = sphi 0, %s107
      %s109 = sphi 0, %s107
      %s110 = sphi 0, %s109
      %s124 = sphi 0, %s110
      %s128 = sphi 0, %s128
      %s130 = sphi 0, %s128
      %s131 = sphi 0, %s130
      %s145 = sphi 0, %s131
      %s149 = sphi 0, %s149
      %s151 = sphi 0, %s149
      %s152 = sphi 0, %s151
      %s166 = sphi 0, %s152
      %s170 = sphi 0, %s170
      %s172 = sphi 0, %s170
      %s173 = sphi 0, %s172
      %s187 = sphi 0, %s173
      %s193 = sphi 0, %s195
      %s196 = sphi 0, %s193
      %s197 = sphi 0, %s196
      %s213 = sphi 0, %s197
    $region4: #{tpu_custom_call.1} parent=1 // loop_header_branch
      %20 = sbr.rel (%p18) target = $region8
    $region5: #{tpu_custom_call.1} parent=1 // loop_body
      %s22 = ssub.s32 %s17, 1
      %s23 = ssub.s32 %s17, 2
      %s30 = sadd.s32 1, %s25
      %p31 = scmp.ge.s32.totalorder %s30, 1
      %s32 = scalar_select %p31, 0, %s30
      %s33 = sadd.s32 1, %s24
      %s34 = scalar_select %p31, %s33, %s24
      %p35 = scmp.ge.s32.totalorder %s34, 2
      %s36 = scalar_select %p35, 0, %s34
      %s37 = ssub.s32 %s24, %s36
      %s38 = ssub.s32 %s25, %s32
      %s39 = sor.u32 %s37, %s38
      %p40 = scmp.eq.s32.totalorder %s39, 0
      %s42 = sadd.s32 %s41, 1
      %s43 = scalar_select %p40, %s41, %s42
      %p46 = pneg %p40
      %p47 = scmp.eq.s32.totalorder %s17, 1
      %p48 = por %p46, %p47
      %p49 = scmp.ne.s32.totalorder %s41, %s44
      %p50 = scmp.eq.s32.totalorder %s17, 0
      %p51 = por %p49, %p50
      %p52 = scmp.ne.s32.totalorder %s41, %s44
      %p53 = scmp.eq.s32.totalorder %s22, 1
      %p54 = por %p52, %p53
      %p55 = scmp.ne.s32.totalorder %s44, %s45
      %p56 = scmp.eq.s32.totalorder %s22, 0
      %p57 = por %p55, %p56
      %p58 = scmp.ne.s32.totalorder %s44, %s45
      %p59 = scmp.eq.s32.totalorder %s23, 1
      %p60 = por %p58, %p59
      %p62 = scmp.ne.s32.totalorder %s45, %s61
      %p63 = scmp.eq.s32.totalorder %s23, 0
      %p64 = por %p62, %p63
      %s66 = sadd.s32 %s65, 1
      %p69 = scmp.eq.s32.totalorder %s17, 1
      %p70 = scmp.ne.s32.totalorder %s65, %s67
      %p71 = scmp.eq.s32.totalorder %s17, 0
      %p72 = por %p70, %p71
      %p73 = scmp.ne.s32.totalorder %s65, %s67
      %p74 = scmp.eq.s32.totalorder %s22, 1
      %p75 = por %p73, %p74
      %p76 = scmp.ne.s32.totalorder %s67, %s68
      %p77 = scmp.eq.s32.totalorder %s22, 0
      %p78 = por %p76, %p77
      %p79 = scmp.ne.s32.totalorder %s67, %s68
      %p80 = scmp.eq.s32.totalorder %s23, 1
      %p81 = por %p79, %p80
      %p83 = scmp.ne.s32.totalorder %s68, %s82
      %p84 = scmp.eq.s32.totalorder %s23, 0
      %p85 = por %p83, %p84
      %s87 = sadd.s32 %s86, 1
      %p90 = scmp.eq.s32.totalorder %s17, 1
      %p91 = scmp.ne.s32.totalorder %s86, %s88
      %p92 = scmp.eq.s32.totalorder %s17, 0
      %p93 = por %p91, %p92
      %p94 = scmp.ne.s32.totalorder %s86, %s88
      %p95 = scmp.eq.s32.totalorder %s22, 1
      %p96 = por %p94, %p95
      %p97 = scmp.ne.s32.totalorder %s88, %s89
      %p98 = scmp.eq.s32.totalorder %s22, 0
      %p99 = por %p97, %p98
      %p100 = scmp.ne.s32.totalorder %s88, %s89
      %p101 = scmp.eq.s32.totalorder %s23, 1
      %p102 = por %p100, %p101
      %p104 = scmp.ne.s32.totalorder %s89, %s103
      %p105 = scmp.eq.s32.totalorder %s23, 0
      %p106 = por %p104, %p105
      %s108 = sadd.s32 %s107, 1
      %p111 = scmp.eq.s32.totalorder %s17, 1
      %p112 = scmp.ne.s32.totalorder %s107, %s109
      %p113 = scmp.eq.s32.totalorder %s17, 0
      %p114 = por %p112, %p113
      %p115 = scmp.ne.s32.totalorder %s107, %s109
      %p116 = scmp.eq.s32.totalorder %s22, 1
      %p117 = por %p115, %p116
      %p118 = scmp.ne.s32.totalorder %s109, %s110
      %p119 = scmp.eq.s32.totalorder %s22, 0
      %p120 = por %p118, %p119
      %p121 = scmp.ne.s32.totalorder %s109, %s110
      %p122 = scmp.eq.s32.totalorder %s23, 1
      %p123 = por %p121, %p122
      %p125 = scmp.ne.s32.totalorder %s110, %s124
      %p126 = scmp.eq.s32.totalorder %s23, 0
      %p127 = por %p125, %p126
      %s129 = sadd.s32 %s128, 1
      %p132 = scmp.eq.s32.totalorder %s17, 1
      %p133 = scmp.ne.s32.totalorder %s128, %s130
      %p134 = scmp.eq.s32.totalorder %s17, 0
      %p135 = por %p133, %p134
      %p136 = scmp.ne.s32.totalorder %s128, %s130
      %p137 = scmp.eq.s32.totalorder %s22, 1
      %p138 = por %p136, %p137
      %p139 = scmp.ne.s32.totalorder %s130, %s131
      %p140 = scmp.eq.s32.totalorder %s22, 0
      %p141 = por %p139, %p140
      %p142 = scmp.ne.s32.totalorder %s130, %s131
      %p143 = scmp.eq.s32.totalorder %s23, 1
      %p144 = por %p142, %p143
      %p146 = scmp.ne.s32.totalorder %s131, %s145
      %p147 = scmp.eq.s32.totalorder %s23, 0
      %p148 = por %p146, %p147
      %s150 = sadd.s32 %s149, 1
      %p153 = scmp.eq.s32.totalorder %s17, 1
      %p154 = scmp.ne.s32.totalorder %s149, %s151
      %p155 = scmp.eq.s32.totalorder %s17, 0
      %p156 = por %p154, %p155
      %p157 = scmp.ne.s32.totalorder %s149, %s151
      %p158 = scmp.eq.s32.totalorder %s22, 1
      %p159 = por %p157, %p158
      %p160 = scmp.ne.s32.totalorder %s151, %s152
      %p161 = scmp.eq.s32.totalorder %s22, 0
      %p162 = por %p160, %p161
      %p163 = scmp.ne.s32.totalorder %s151, %s152
      %p164 = scmp.eq.s32.totalorder %s23, 1
      %p165 = por %p163, %p164
      %p167 = scmp.ne.s32.totalorder %s152, %s166
      %p168 = scmp.eq.s32.totalorder %s23, 0
      %p169 = por %p167, %p168
      %s171 = sadd.s32 %s170, 1
      %p174 = scmp.eq.s32.totalorder %s17, 1
      %p175 = scmp.ne.s32.totalorder %s170, %s172
      %p176 = scmp.eq.s32.totalorder %s17, 0
      %p177 = por %p175, %p176
      %p178 = scmp.ne.s32.totalorder %s170, %s172
      %p179 = scmp.eq.s32.totalorder %s22, 1
      %p180 = por %p178, %p179
      %p181 = scmp.ne.s32.totalorder %s172, %s173
      %p182 = scmp.eq.s32.totalorder %s22, 0
      %p183 = por %p181, %p182
      %p184 = scmp.ne.s32.totalorder %s172, %s173
      %p185 = scmp.eq.s32.totalorder %s23, 1
      %p186 = por %p184, %p185
      %p188 = scmp.ne.s32.totalorder %s173, %s187
      %p189 = scmp.eq.s32.totalorder %s23, 0
      %p190 = por %p188, %p189
      %s191 = ssub.s32 %s24, %s36
      %p192 = scmp.eq.s32.totalorder %s191, 0
      %s194 = sadd.s32 %s193, 1
      %s195 = scalar_select %p192, %s193, %s194
      %p198 = pneg %p192
      %p199 = scmp.eq.s32.totalorder %s17, 1
      %p200 = por %p198, %p199
      %p201 = scmp.ne.s32.totalorder %s193, %s196
      %p202 = scmp.eq.s32.totalorder %s17, 0
      %p203 = por %p201, %p202
      %p204 = scmp.ne.s32.totalorder %s193, %s196
      %p205 = scmp.eq.s32.totalorder %s22, 1
      %p206 = por %p204, %p205
      %p207 = scmp.ne.s32.totalorder %s196, %s197
      %p208 = scmp.eq.s32.totalorder %s22, 0
      %p209 = por %p207, %p208
      %p210 = scmp.ne.s32.totalorder %s196, %s197
      %p211 = scmp.eq.s32.totalorder %s23, 1
      %p212 = por %p210, %p211
      %p214 = scmp.ne.s32.totalorder %s197, %s213
      %p215 = scmp.eq.s32.totalorder %s23, 0
      %p216 = por %p214, %p215
      %p217 = scmp.le.s32.totalorder 1, %s17
      %p218 = scmp.lt.s32.totalorder %s17, 3
      %p219 = pnand %p217, %p218
      %p220 = pneg %p219
      // Predicated region
      $region9: #{tpu_custom_call.1} parent=5 // pred_check
        _
      $region10: #{tpu_custom_call.1} parent=5 // pred_check_branch
        %222 = sbr.rel (%p219) target = $region12
      $region11: #{tpu_custom_call.1} parent=5 // pred_region
        %s223 = ssub.s32 %s17, 1
        // Predicated region
        $region13: #{tpu_custom_call.1} parent=11 // pred_check
          %p224 = pneg %p78
        $region14: #{tpu_custom_call.1} parent=11 // pred_check_branch
          %226 = sbr.rel (%p224) target = $region16
        $region15: #{tpu_custom_call.1} parent=11 // pred_region
          _
        $region16: #{tpu_custom_call.1} parent=11 // pred_fallthru
          _
        // Predicated region
        $region17: #{tpu_custom_call.1} parent=11 // pred_check
          %p227 = pneg %p99
        $region18: #{tpu_custom_call.1} parent=11 // pred_check_branch
          %229 = sbr.rel (%p227) target = $region20
        $region19: #{tpu_custom_call.1} parent=11 // pred_region
          _
        $region20: #{tpu_custom_call.1} parent=11 // pred_fallthru
          _
        // Predicated region
        $region21: #{tpu_custom_call.1} parent=11 // pred_check
          %p230 = pneg %p120
        $region22: #{tpu_custom_call.1} parent=11 // pred_check_branch
          %232 = sbr.rel (%p230) target = $region24
        $region23: #{tpu_custom_call.1} parent=11 // pred_region
          _
        $region24: #{tpu_custom_call.1} parent=11 // pred_fallthru
          _
        // Predicated region
        $region25: #{tpu_custom_call.1} parent=11 // pred_check
          %p233 = pneg %p141
        $region26: #{tpu_custom_call.1} parent=11 // pred_check_branch
          %235 = sbr.rel (%p233) target = $region28
        $region27: #{tpu_custom_call.1} parent=11 // pred_region
          _
        $region28: #{tpu_custom_call.1} parent=11 // pred_fallthru
          _
        // Predicated region
        $region29: #{tpu_custom_call.1} parent=11 // pred_check
          %p236 = pneg %p162
        $region30: #{tpu_custom_call.1} parent=11 // pred_check_branch
          %238 = sbr.rel (%p236) target = $region32
        $region31: #{tpu_custom_call.1} parent=11 // pred_region
          %s240 = ssub.s32 2048, 2048
          %241 = vsyncadd [#allocation4], %s240
          %s242 = sshll.u32 [#allocation3], 4
          %s243 = int_to_ptr.vmem [resolvable:$true] %s242
          %248 = dma.hbm_to_vmem [thread:$0]  %s5, 2048, %s243, [#allocation4], 128, 128, 8
        $region32: #{tpu_custom_call.1} parent=11 // pred_fallthru
          _
        // Predicated region
        $region33: #{tpu_custom_call.1} parent=11 // pred_check
          %p249 = pneg %p183
        $region34: #{tpu_custom_call.1} parent=11 // pred_check_branch
          %251 = sbr.rel (%p249) target = $region36
        $region35: #{tpu_custom_call.1} parent=11 // pred_region
          _
        $region36: #{tpu_custom_call.1} parent=11 // pred_fallthru
          _
      $region12: #{tpu_custom_call.1} parent=5 // pred_fallthru
        _
      %p252 = scmp.lt.s32.totalorder %s17, 2
      // Predicated region
      $region37: #{tpu_custom_call.1} parent=5 // pred_check
        %p253 = pneg %p252
      $region38: #{tpu_custom_call.1} parent=5 // pred_check_branch
        %255 = sbr.rel (%p253) target = $region40
      $region39: #{tpu_custom_call.1} parent=5 // pred_region
        // Predicated region
        $region41: #{tpu_custom_call.1} parent=39 // pred_check
          %p256 = pneg %p51
        $region42: #{tpu_custom_call.1} parent=39 // pred_check_branch
          %258 = sbr.rel (%p256) target = $region44
        $region43: #{tpu_custom_call.1} parent=39 // pred_region
          %s259 = smul.u32 2, %s25
          %p260 = scmp.lt.s32.totalorder %s24, 1
          %s261 = scalar_select %p260, %s24, 1
          %p262 = scmp.lt.s32.totalorder %s259, 1
          %s263 = scalar_select %p262, %s259, 1
          %s264 = smul.addr %s261, 2
          %s265 = sadd.s32 %s263, %s264
          %s266 = smul.addr %s265, 8
          %s267 = scalar_lea.vmem %s0, %s266
          %s268 = smul.u32 2, %s25
        $region44: #{tpu_custom_call.1} parent=39 // pred_fallthru
          _
      $region40: #{tpu_custom_call.1} parent=5 // pred_fallthru
        _
      %p269 = scmp.le.s32.totalorder 1, %s17
      %p270 = scmp.lt.s32.totalorder %s17, 3
      %p271 = pnand %p269, %p270
      %p272 = pneg %p271
      // Predicated region
      $region45: #{tpu_custom_call.1} parent=5 // pred_check
        _
      $region46: #{tpu_custom_call.1} parent=5 // pred_check_branch
        %274 = sbr.rel (%p271) target = $region48
      $region47: #{tpu_custom_call.1} parent=5 // pred_region
        %s275 = ssub.s32 %s17, 1
        // Predicated region
        $region49: #{tpu_custom_call.1} parent=47 // pred_check
          %p276 = pneg %p162
        $region50: #{tpu_custom_call.1} parent=47 // pred_check_branch
          %278 = sbr.rel (%p276) target = $region52
        $region51: #{tpu_custom_call.1} parent=47 // pred_region
          %279 = dma.done [#allocation4], 2048
        $region52: #{tpu_custom_call.1} parent=47 // pred_fallthru
          _
        %s280 = smul.u32 2, %s27
        %p281 = scmp.lt.s32.totalorder %s26, 1
        %s282 = scalar_select %p281, %s26, 1
        %p283 = scmp.lt.s32.totalorder %s280, 1
        %s284 = scalar_select %p283, %s280, 1
        %s285 = smul.addr %s282, 2
        %s286 = sadd.s32 %s284, %s285
        %s287 = smul.addr %s286, 8
        %s288 = scalar_lea.vmem %s0, %s287
        %p289 = pneg %p57
        %p290 = pneg %p54
        %p291 = pneg %p78
        %p292 = pneg %p75
        %p293 = pneg %p99
        %p294 = pneg %p96
        %p295 = pneg %p120
        %p296 = pneg %p117
        %p297 = pneg %p141
        %p298 = pneg %p138
        %p299 = pneg %p162
        %p300 = pneg %p159
        %p301 = pneg %p183
        %p302 = pneg %p180
        %p303 = pneg %p209
        %p304 = pneg %p206
        %s305 = sand.u32 %s196, 1
        %s306 = scalar_lea.sflag [#allocation5], %s305
        %s307 = sand.u32 %s196, 1
        %s308 = smul.addr %s307, 2
        %s309 = scalar_lea.vmem [#allocation6], %s308
        %s310 = smul.u32 2, %s27
        %p311 = scmp.lt.s32.totalorder %s26, 1
        %s312 = scalar_select %p311, %s26, 1
        %p313 = scmp.lt.s32.totalorder %s310, 1
        %s314 = scalar_select %p313, %s310, 1
        %s315 = smul.addr %s312, 2
        %s316 = sadd.s32 %s314, %s315
        %s317 = smul.addr %s316, 8
        %s318 = scalar_lea.vmem %s0, %s317
        %s319 = smul.u32 2, %s27
        %p321 = scmp.eq.s32.totalorder %s27, 0
        // Predicated region
        $region53: #{tpu_custom_call.1} parent=47 // pred_check
          %p322 = pneg %p321
        $region54: #{tpu_custom_call.1} parent=47 // pred_check_branch
          %324 = sbr.rel (%p322) target = $region56
        $region55: #{tpu_custom_call.1} parent=47 // pred_region
          %325 = vst [vmem:[#allocation2] sm:$0xff] 0.0
          %326 = vst [vmem:[#allocation2 + $0x8] sm:$0xff] 0.0
        $region56: #{tpu_custom_call.1} parent=47 // pred_fallthru
          _
        %v327 = vld [vmem:[%s318] sm:$0xff]
        %v328 = vld [vmem:[%s318 + $0x8] sm:$0xff]
        %v329 = vld [vmem:[%s1] sm:$0x3]
        %v330 = vld [vmem:[%s2] sm:$0x1]
        %v331 = vpack.c.bf16 %v328, %v327
        %v333 = vlaneseq
        %v334 = vshrl.u32 %v333, 7
        %v335 = vsub.s32 0, %v334
        %v336 = vrot.slane %v330, %v335
        %vm338 = vcmask 23552
        %v340 = vsel %vm338, %v331, 0
        %vm342 = vcmask 1040384
        %vm343 = vcmask 1041408
        %v344 = vsel %vm342, 4294967295, 65535
        %v345 = vsel %vm343, %v344, 0
        %v347 = vand.u32 %v329, %v345
        %349 = vmatprep.subr.bf16.mxu0 0
        %350 = vmatpush1.bf16.msra.mxu0 0
        %351 = vmatprep.subr.bf16.mxu0 0
        %352 = vmatpush1.bf16.msra.mxu0 0
        %353 = vmatprep.subr.bf16.mxu0 0
        %354 = vmatpush1.bf16.msra.mxu0 0
        %355 = vmatprep.subr.bf16.mxu0 0
        %356 = vmatpush1.bf16.msra.mxu0 0
        %357 = vmatprep.subr.bf16.mxu0 0
        %358 = vmatpush1.bf16.msra.mxu0 0
        %359 = vmatprep.subr.bf16.mxu0 0
        %360 = vmatpush1.bf16.msra.mxu0 0
        %361 = vmatprep.subr.bf16.mxu0 0
        %362 = vmatpush1.bf16.msra.mxu0 0
        %363 = vmatprep.subr.bf16.mxu0 0
        %364 = vmatpush1.bf16.msra.mxu0 %v347
        %365 = vmatprep.subr.bf16.mxu0 0
        %366 = vmatpush2.bf16.msra.mxu0 0
        %367 = vmatprep.subr.bf16.mxu0 0
        %368 = vmatpush2.bf16.msra.mxu0 0
        %369 = vmatprep.subr.bf16.mxu0 0
        %370 = vmatpush2.bf16.msra.mxu0 0
        %371 = vmatprep.subr.bf16.mxu0 0
        %372 = vmatpush2.bf16.msra.mxu0 0
        %373 = vmatprep.subr.bf16.mxu0 0
        %374 = vmatpush2.bf16.msra.mxu0 0
        %375 = vmatprep.subr.bf16.mxu0 0
        %376 = vmatpush2.bf16.msra.mxu0 0
        %377 = vmatprep.subr.bf16.mxu0 0
        %378 = vmatpush2.bf16.msra.mxu0 0
        %379 = vmatprep.subr.bf16.mxu0 0
        %380 = vmatpush2.bf16.msra.mxu0 0
        %381 = vmatprep.mubr.bf16.mxu0 0
        %382 = vmatmul.mubr.bf16.gmra.mxu0 %v340
        %v383 = vpop.f32.mrf.mxu0
        %v384 = vadd.f32 %v336, %v383
        %v385 = vpop.f32.mrf.mxu0
        %v386 = vpop.f32.mrf.mxu0
        %v387 = vadd.f32 %v336, %v386
        %v388 = vpop.f32.mrf.mxu0
        %389 = vdwg.mxu0
        %v390 = vmax.f32 %v384, 0.0
        %v391 = vmax.f32 %v387, 0.0
        %v392 = vld [vmem:[%s3] sm:$0xf]
        %v393 = vld [vmem:[%s3 + $0x4] sm:$0xf]
        %v394 = vld [vmem:[%s3 + $0x8] sm:$0xf]
        %v395 = vld [vmem:[%s3 + $0xc] sm:$0xf]
        %v396 = vld [vmem:[%s3 + $0x10] sm:$0xf]
        %v397 = vld [vmem:[%s3 + $0x14] sm:$0xf]
        %v398 = vld [vmem:[%s3 + $0x18] sm:$0xf]
        %v399 = vld [vmem:[%s3 + $0x1c] sm:$0xf]
        %v400 = vld [vmem:[%s4] sm:$0x1]
        %v401 = vpack.c.bf16 %v391, %v390
        %v403 = vlaneseq
        %v404 = vshrl.u32 %v403, 7
        %v405 = vsub.s32 0, %v404
        %v406 = vrot.slane %v400, %v405
        %v416 = vunpack.c.l.b16 %v392
        %v417 = vunpack.c.l.b16 %v393
        %v418 = vunpack.c.l.b16 %v394
        %v419 = vunpack.c.l.b16 %v395
        %v420 = vunpack.c.l.b16 %v396
        %v421 = vunpack.c.l.b16 %v397
        %v422 = vunpack.c.l.b16 %v398
        %v423 = vunpack.c.l.b16 %v399
        %v424 = vpack.c.b16 %v417, %v416
        %v425 = vpack.c.b16 %v419, %v418
        %v426 = vpack.c.b16 %v421, %v420
        %v427 = vpack.c.b16 %v423, %v422
        %vm432 = vcmask 523264
        %v434 = vsel %vm432, %v401, 0
        %436 = vmatprep.subr.bf16.mxu0 0
        %437 = vmatpush1.bf16.msra.mxu0 0
        %438 = vmatprep.subr.bf16.mxu0 0
        %439 = vmatpush1.bf16.msra.mxu0 0
        %440 = vmatprep.subr.bf16.mxu0 0
        %441 = vmatpush1.bf16.msra.mxu0 0
        %442 = vmatprep.subr.bf16.mxu0 0
        %443 = vmatpush1.bf16.msra.mxu0 0
        %444 = vmatprep.subr.bf16.mxu0 0
        %445 = vmatpush1.bf16.msra.mxu0 %v427
        %446 = vmatprep.subr.bf16.mxu0 0
        %447 = vmatpush1.bf16.msra.mxu0 %v426
        %448 = vmatprep.subr.bf16.mxu0 0
        %449 = vmatpush1.bf16.msra.mxu0 %v425
        %450 = vmatprep.subr.bf16.mxu0 0
        %451 = vmatpush1.bf16.msra.mxu0 %v424
        %452 = vmatprep.subr.bf16.mxu0 0
        %453 = vmatpush2.bf16.msra.mxu0 0
        %454 = vmatprep.subr.bf16.mxu0 0
        %455 = vmatpush2.bf16.msra.mxu0 0
        %456 = vmatprep.subr.bf16.mxu0 0
        %457 = vmatpush2.bf16.msra.mxu0 0
        %458 = vmatprep.subr.bf16.mxu0 0
        %459 = vmatpush2.bf16.msra.mxu0 0
        %460 = vmatprep.subr.bf16.mxu0 0
        %461 = vmatpush2.bf16.msra.mxu0 0
        %462 = vmatprep.subr.bf16.mxu0 0
        %463 = vmatpush2.bf16.msra.mxu0 0
        %464 = vmatprep.subr.bf16.mxu0 0
        %465 = vmatpush2.bf16.msra.mxu0 0
        %466 = vmatprep.subr.bf16.mxu0 0
        %467 = vmatpush2.bf16.msra.mxu0 0
        %468 = vmatprep.mubr.bf16.mxu0 0
        %469 = vmatmul.mubr.bf16.gmra.mxu0 %v434
        %v470 = vpop.f32.mrf.mxu0
        %v471 = vadd.f32 %v406, %v470
        %v472 = vpop.f32.mrf.mxu0
        %v473 = vpop.f32.mrf.mxu0
        %v474 = vadd.f32 %v406, %v473
        %v475 = vpop.f32.mrf.mxu0
        %476 = vdwg.mxu0
        %v477 = vmax.f32 %v471, 0.0
        %v478 = vmax.f32 %v474, 0.0
        %v479 = vld [vmem:[#allocation3] sm:$0xff]
        %v480 = vld [vmem:[#allocation3 + $0x8] sm:$0xff]
        %v481 = vld [vmem:[#allocation3 + $0x10] sm:$0xff]
        %v482 = vld [vmem:[#allocation3 + $0x18] sm:$0xff]
        %v483 = vld [vmem:[#allocation3 + $0x20] sm:$0xff]
        %v484 = vld [vmem:[#allocation3 + $0x28] sm:$0xff]
        %v485 = vld [vmem:[#allocation3 + $0x30] sm:$0xff]
        %v486 = vld [vmem:[#allocation3 + $0x38] sm:$0xff]
        %v487 = vld [vmem:[#allocation3 + $0x40] sm:$0xff]
        %v488 = vld [vmem:[#allocation3 + $0x48] sm:$0xff]
        %v489 = vld [vmem:[#allocation3 + $0x50] sm:$0xff]
        %v490 = vld [vmem:[#allocation3 + $0x58] sm:$0xff]
        %v491 = vld [vmem:[#allocation3 + $0x60] sm:$0xff]
        %v492 = vld [vmem:[#allocation3 + $0x68] sm:$0xff]
        %v493 = vld [vmem:[#allocation3 + $0x70] sm:$0xff]
        %v494 = vld [vmem:[#allocation3 + $0x78] sm:$0xff]
        %v495 = vld [vmem:[%s6] sm:$0x3]
        %v496 = vpack.c.bf16 %v478, %v477
        %v498 = vlaneseq
        %v499 = vshrl.u32 %v498, 7
        %v500 = vsub.s32 0, %v499
        %v501 = vrot.slane %v495, %v500
        %v502 = vlaneseq
        %v503 = vshrl.u32 %v502, 7
        %v504 = vsub.s32 1, %v503
        %v505 = vrot.slane %v495, %v504
        %v524 = vunpack.c.l.b16 %v479
        %v525 = vunpack.c.h.b16 %v479
        %v526 = vunpack.c.l.b16 %v480
        %v527 = vunpack.c.h.b16 %v480
        %v528 = vunpack.c.l.b16 %v481
        %v529 = vunpack.c.h.b16 %v481
        %v530 = vunpack.c.l.b16 %v482
        %v531 = vunpack.c.h.b16 %v482
        %v532 = vunpack.c.l.b16 %v483
        %v533 = vunpack.c.h.b16 %v483
        %v534 = vunpack.c.l.b16 %v484
        %v535 = vunpack.c.h.b16 %v484
        %v536 = vunpack.c.l.b16 %v485
        %v537 = vunpack.c.h.b16 %v485
        %v538 = vunpack.c.l.b16 %v486
        %v539 = vunpack.c.h.b16 %v486
        %v540 = vunpack.c.l.b16 %v487
        %v541 = vunpack.c.h.b16 %v487
        %v542 = vunpack.c.l.b16 %v488
        %v543 = vunpack.c.h.b16 %v488
        %v544 = vunpack.c.l.b16 %v489
        %v545 = vunpack.c.h.b16 %v489
        %v546 = vunpack.c.l.b16 %v490
        %v547 = vunpack.c.h.b16 %v490
        %v548 = vunpack.c.l.b16 %v491
        %v549 = vunpack.c.h.b16 %v491
        %v550 = vunpack.c.l.b16 %v492
        %v551 = vunpack.c.h.b16 %v492
        %v552 = vunpack.c.l.b16 %v493
        %v553 = vunpack.c.h.b16 %v493
        %v554 = vunpack.c.l.b16 %v494
        %v555 = vunpack.c.h.b16 %v494
        %v556 = vpack.c.b16 %v526, %v524
        %v557 = vpack.c.b16 %v527, %v525
        %v558 = vpack.c.b16 %v530, %v528
        %v559 = vpack.c.b16 %v531, %v529
        %v560 = vpack.c.b16 %v534, %v532
        %v561 = vpack.c.b16 %v535, %v533
        %v562 = vpack.c.b16 %v538, %v536
        %v563 = vpack.c.b16 %v539, %v537
        %v564 = vpack.c.b16 %v542, %v540
        %v565 = vpack.c.b16 %v543, %v541
        %v566 = vpack.c.b16 %v546, %v544
        %v567 = vpack.c.b16 %v547, %v545
        %v568 = vpack.c.b16 %v550, %v548
        %v569 = vpack.c.b16 %v551, %v549
        %v570 = vpack.c.b16 %v554, %v552
        %v571 = vpack.c.b16 %v555, %v553
        %588 = vmatprep.subr.bf16.mxu0 %v571
        %589 = vmatpush1.bf16.msra.mxu0 %v570
        %590 = vmatprep.subr.bf16.mxu0 %v569
        %591 = vmatpush1.bf16.msra.mxu0 %v568
        %592 = vmatprep.subr.bf16.mxu0 %v567
        %593 = vmatpush1.bf16.msra.mxu0 %v566
        %594 = vmatprep.subr.bf16.mxu0 %v565
        %595 = vmatpush1.bf16.msra.mxu0 %v564
        %596 = vmatprep.subr.bf16.mxu0 %v563
        %597 = vmatpush1.bf16.msra.mxu0 %v562
        %598 = vmatprep.subr.bf16.mxu0 %v561
        %599 = vmatpush1.bf16.msra.mxu0 %v560
        %600 = vmatprep.subr.bf16.mxu0 %v559
        %601 = vmatpush1.bf16.msra.mxu0 %v558
        %602 = vmatprep.subr.bf16.mxu0 %v557
        %603 = vmatpush1.bf16.msra.mxu0 %v556
        %604 = vmatprep.subr.bf16.mxu0 0
        %605 = vmatpush2.bf16.msra.mxu0 0
        %606 = vmatprep.subr.bf16.mxu0 0
        %607 = vmatpush2.bf16.msra.mxu0 0
        %608 = vmatprep.subr.bf16.mxu0 0
        %609 = vmatpush2.bf16.msra.mxu0 0
        %610 = vmatprep.subr.bf16.mxu0 0
        %611 = vmatpush2.bf16.msra.mxu0 0
        %612 = vmatprep.subr.bf16.mxu0 0
        %613 = vmatpush2.bf16.msra.mxu0 0
        %614 = vmatprep.subr.bf16.mxu0 0
        %615 = vmatpush2.bf16.msra.mxu0 0
        %616 = vmatprep.subr.bf16.mxu0 0
        %617 = vmatpush2.bf16.msra.mxu0 0
        %618 = vmatprep.subr.bf16.mxu0 0
        %619 = vmatpush2.bf16.msra.mxu0 0
        %620 = vmatprep.mubr.bf16.mxu0 0
        %621 = vmatmul.mubr.bf16.gmra.mxu0 %v496
        %v622 = vpop.f32.mrf.mxu0
        %v623 = vadd.f32 %v501, %v622
        %v624 = vpop.f32.mrf.mxu0
        %v625 = vadd.f32 %v505, %v624
        %v626 = vpop.f32.mrf.mxu0
        %v627 = vadd.f32 %v501, %v626
        %v628 = vpop.f32.mrf.mxu0
        %v629 = vadd.f32 %v505, %v628
        %630 = vdwg.mxu0
        %v631 = vmax.f32 %v623, 0.0
        %v632 = vmax.f32 %v625, 0.0
        %v633 = vmax.f32 %v627, 0.0
        %v634 = vmax.f32 %v629, 0.0
        %v635 = vmax.f32 %v631, %v633
        %v636 = vmax.f32 %v632, %v634
        %v637 = vld [vmem:[#allocation2] sm:$0xff]
        %v638 = vld [vmem:[#allocation2 + $0x8] sm:$0xff]
        %v639 = vmax.f32 %v637, %v635
        %v640 = vmax.f32 %v638, %v636
        %641 = vst [vmem:[#allocation2] sm:$0xff] %v639
        %642 = vst [vmem:[#allocation2 + $0x8] sm:$0xff] %v640
        // Predicated region
        $region57: #{tpu_custom_call.1} parent=47 // pred_check
          %p643 = pneg %p321
        $region58: #{tpu_custom_call.1} parent=47 // pred_check_branch
          %645 = sbr.rel (%p643) target = $region60
        $region59: #{tpu_custom_call.1} parent=47 // pred_region
          %v646 = vld [vmem:[#allocation2] sm:$0xff]
          %v647 = vld [vmem:[#allocation2 + $0x8] sm:$0xff]
          %v648 = vrot.slane %v646, 4
          %v649 = vmax.f32 %v646, %v648
          %v650 = vrot.slane %v649, 2
          %v651 = vmax.f32 %v649, %v650
          %v652 = vrot.slane %v651, 1
          %v653 = vmax.f32 %v651, %v652
          %v654 = vrot.slane %v647, 4
          %v655 = vmax.f32 %v647, %v654
          %v656 = vrot.slane %v655, 2
          %v657 = vmax.f32 %v655, %v656
          %v658 = vrot.slane %v657, 1
          %v659 = vmax.f32 %v657, %v658
          %v662 = vcombine.low %v653, %v659
          %v664 = vunpack.c.l.s4 1966171168
          %v665 = vunpack.c.0.s8 %v664
          %v666 = vlaneseq
          %v667 = vshrl.u32 %v666, 7
          %v668 = vsub.s32 %v665, %v667
          %v669 = vrot.slane %v662, %v668
          %v671 = vunpack.c.l.s4 1966171168
          %v672 = vunpack.c.0.s8 %v671
          %v673 = vlaneseq
          %v674 = vshrl.u32 %v673, 7
          %v675 = vsub.s32 %v672, %v674
          %v676 = vrot.slane %v669, %v675
          %v678 = vlaneseq
          %vm679 = vcmp.ge.s32.totalorder %v678, 0
          %vm680 = vcmp.lt.s32.totalorder %v678, 256
          %vm681 = vmand %vm679, %vm680
          %682 = vst.msk [vmem:[%s309] sm:$0x3] %vm681, %v676
        $region60: #{tpu_custom_call.1} parent=47 // pred_fallthru
          _
        %s683 = sand.u32 %s196, 1
        %s684 = scalar_lea.sflag [#allocation5], %s683
        %s685 = sand.u32 %s196, 1
        %s686 = smul.addr %s685, 2
        %s687 = scalar_lea.vmem [#allocation6], %s686
        // Predicated region
        $region61: #{tpu_custom_call.1} parent=47 // pred_check
          %p688 = pneg %p206
        $region62: #{tpu_custom_call.1} parent=47 // pred_check_branch
          %690 = sbr.rel (%p688) target = $region64
        $region63: #{tpu_custom_call.1} parent=47 // pred_region
          %s692 = ssub.s32 32, 32
          %693 = vsyncadd %s684, %s692
          %s694 = smul.addr %s26, 2
          %s695 = smul.addr %s694, 16
          %s696 = scalar_lea.hbm %s7, %s695
          %s698 = sshll.u32 %s687, 4
          %s699 = int_to_ptr.vmem [resolvable:$true] %s698
          %701 = dma.vmem_to_hbm [thread:$0]  %s699, 32, %s696, %s684
        $region64: #{tpu_custom_call.1} parent=47 // pred_fallthru
          _
      $region48: #{tpu_custom_call.1} parent=5 // pred_fallthru
        _
      %p702 = scmp.le.s32.totalorder 2, %s17
      // Predicated region
      $region65: #{tpu_custom_call.1} parent=5 // pred_check
        %p703 = pneg %p702
      $region66: #{tpu_custom_call.1} parent=5 // pred_check_branch
        %705 = sbr.rel (%p703) target = $region68
      $region67: #{tpu_custom_call.1} parent=5 // pred_region
        %s706 = ssub.s32 %s17, 2
        // Predicated region
        $region69: #{tpu_custom_call.1} parent=67 // pred_check
          %p707 = pneg %p212
        $region70: #{tpu_custom_call.1} parent=67 // pred_check_branch
          %709 = sbr.rel (%p707) target = $region72
        $region71: #{tpu_custom_call.1} parent=67 // pred_region
          %s710 = sand.u32 %s197, 1
          %s711 = scalar_lea.sflag [#allocation5], %s710
          %s712 = sand.u32 %s197, 1
          %s713 = smul.addr %s712, 2
          %s714 = scalar_lea.vmem [#allocation6], %s713
          %715 = dma.done %s711, 32
        $region72: #{tpu_custom_call.1} parent=67 // pred_fallthru
          _
      $region68: #{tpu_custom_call.1} parent=5 // pred_fallthru
        _
    $region6: #{tpu_custom_call.1} parent=1 // loop_footer
      %s21 = sadd.s32 1, %s17
    $region7: #{tpu_custom_call.1} parent=1 // loop_footer_branch
      %16 = sbr.rel target = $region3
    $region8: #{tpu_custom_call.1} parent=1 // loop_exit
      _
    %716 = vsyncpa [#allocation4], 1
    %s717 = scalar_lea.sflag [#allocation4], 1
    %718 = vsyncpa %s717, 1
    %719 = vsyncpa [#allocation5], 1
    %s720 = scalar_lea.sflag [#allocation5], 1
    %721 = vsyncpa %s720, 1

</llo_original>
